<compile_context>
chip_gen: v5e
topology: v5e:2x2
jax: 0.10.0
libtpu: 0.0.40
codegen_flags: <defaults>
</compile_context>

<pallas_src>
import functools

import jax
import jax.numpy as jnp
from jax.experimental import pallas as pl
from jax.experimental.pallas import tpu as pltpu

# MXU-operand dtype. f32 keeps the tight self-test tolerances below; on
# v5e/v6e/v7x set to jnp.bfloat16 to halve the A/F/xw HBM streams and run the
# MXU at its full bf16 rate.  All accumulations, the RC statistics and every
# VPU/EUP elementwise op (sigmoid/tanh, gate math) stay f32 regardless, so the
# switch is also safe on v5e (no bf16 VALU/EUP there).
COMPUTE_DTYPE = jnp.float32


def _round_up(x, m):
    return ((x + m - 1) // m) * m


def _vmem_limit_bytes():
    """Scoped-VMEM request: ~85% of this chip's per-core VMEM capacity
    (headroom for Mosaic internal scratch); conservative 64 MiB fallback."""
    cap = 64 * 1024 * 1024
    try:
        cap = int(getattr(pltpu.get_tpu_info(), "vmem_capacity_bytes", cap))
    except Exception:
        pass
    return int(cap * 0.85)


def _pick_batch_tile(b, m, cf, hwp, gp, in_bytes, xw_bytes, budget, cap=8):
    """Largest divisor of b (<= cap) whose kernel-1 VMEM footprint fits budget."""
    best = 1
    for bt in range(1, min(b, cap) + 1):
        if b % bt:
            continue
        need = (
            2 * bt * (m + cf) * hwp * in_bytes        # double-buffered A / F blocks
            + 2 * bt * m * gp * xw_bytes              # double-buffered xw out block
            + 2 * (cf * gp * in_bytes + 2 * m * cf * 4 + gp * 4)  # wx / C / bias / cnew
            + 2 * m * cf * 4                          # s1 / s2 scratch
            + 2 * bt * m * (cf + gp) * 4              # in-kernel live V / XW values
        )
        if need <= budget:
            best = bt
    return best


# ---------------- BAP + RCLoss + fused LSTM input projection ------------------
def bap_rc_proj_kernel(a_ref, f_ref, c_ref, wx_ref, b_ref,
                       xw_ref, loss_ref, cnew_ref,
                       s1_scr, s2_scr,
                       *, inv_hw, beta, total_b, inv_bd):
    # a_ref : (bt, M, HWp)  f_ref : (bt, Cf, HWp)  c_ref : (M, Cf)
    # wx_ref: (Cf, 4*Hp)    b_ref : (1, 4*Hp)      xw_ref: (bt, M, 4*Hp)
    # loss_ref: (1, 1)      cnew_ref: (M, Cf)      s1/s2 scratch: (M, Cf)
    bblk = pl.program_id(0)
    bt, m, _ = a_ref.shape

    c_old = c_ref[...]                       # (M, Cf) f32

    vs = []
    s1_add = None
    s2_add = None
    for bb in range(bt):                     # static unroll over the small batch tile
        # Pooled bilinear features: contract over HWp on both operands (the MXU
        # consumes the transposed RHS directly, no XLU transpose of F).  The
        # zero padding of HW contributes nothing to the dot; inv_hw = 1/true_HW.
        v_b = jax.lax.dot_general(
            a_ref[bb], f_ref[bb],
            dimension_numbers=(((1,), (1,)), ((), ())),
            preferred_element_type=jnp.float32) * inv_hw          # (M, Cf) f32
        vs.append(v_b)
        dv = v_b - c_old                     # centered stats: better conditioned
        s1_add = dv if s1_add is None else s1_add + dv
        s2_add = dv * dv if s2_add is None else s2_add + dv * dv

    # Hoisted LSTM input projection: ONE fused matmul over all bt*M rows (a
    # single MXU RHS push) with the bias folded in, instead of bt tiny dots.
    v_all = vs[0] if bt == 1 else jnp.concatenate(vs, axis=0)     # (bt*M, Cf)
    xw_all = (jnp.dot(v_all.astype(COMPUTE_DTYPE), wx_ref[...],
                      preferred_element_type=jnp.float32)
              + b_ref[...]).astype(xw_ref.dtype)                  # (bt*M, 4*Hp)
    for bb in range(bt):
        xw_ref[bb] = xw_all[bb * m:(bb + 1) * m, :]

    @pl.when(bblk == 0)
    def _():
        s1_scr[...] = jnp.zeros_like(s1_scr)
        s2_scr[...] = jnp.zeros_like(s2_scr)

    s1_scr[...] += s1_add
    s2_scr[...] += s2_add

    @pl.when(bblk == pl.num_programs(0) - 1)
    def _():
        s1 = s1_scr[...]                     # sum_b (V - C_old)
        s2 = s2_scr[...]                     # sum_b (V - C_old)^2
        # C_new = C_old + beta * sum_b(V - C_old) / B
        c_new = c_old + (beta / total_b) * s1
        cnew_ref[...] = c_new
        # sum_b |V - C_new|^2 = s2 - (2*beta/B)|s1|^2 + (beta^2/B)|s1|^2
        s1_sq = jnp.sum(s1 * s1, keepdims=True)                   # (1, 1)
        loss_ref[...] = (jnp.sum(s2, keepdims=True)
                         + ((beta * beta - 2.0 * beta) / total_b) * s1_sq) * inv_bd
        # TODO(synk): a scalar SMEM output (memory_space=pltpu.SMEM) would avoid
        # the padded (1,1) VMEM tile writeback; kept in VMEM for compile safety.


# --------------------------- LSTM recurrence kernel ---------------------------
def lstm_recurrence_kernel(xw_ref, wh_ref, h_ref, *, hp, m):
    # xw_ref: (B, M, 4*Hp) gate pre-activations (x@Wx + b), fully VMEM-resident
    # wh_ref: (Hp, 4*Hp)   h_ref : (B, Hp)
    b = xw_ref.shape[0]
    wh = wh_ref[...]
    h = jnp.zeros((b, hp), jnp.float32)
    c = jnp.zeros((b, hp), jnp.float32)
    # TODO(synk): pin wh in the MXU weight registers across timesteps via
    # pltpu.matmul_push_rhs / matmul_acc_lhs / matmul_pop (RHS is identical
    # every step); plain jnp.dot re-pushes it each step.
    for t in range(m):                       # static unroll; M is small for CFJLNet
        x_t = xw_ref[:, t, :].astype(jnp.float32)                 # (B, 4*Hp)
        if t == 0:
            gates = x_t                      # h == 0 -> skip the first h@Wh matmul
        else:
            gates = x_t + jnp.dot(h.astype(COMPUTE_DTYPE), wh,
                                  preferred_element_type=jnp.float32)
        i = jax.nn.sigmoid(gates[:, 0 * hp:1 * hp])
        f = jax.nn.sigmoid(gates[:, 1 * hp:2 * hp])
        o = jax.nn.sigmoid(gates[:, 2 * hp:3 * hp])
        g = jnp.tanh(gates[:, 3 * hp:4 * hp])
        c = f * c + i * g
        h = o * jnp.tanh(c)
    h_ref[...] = h


# ------------------------------ weight packing --------------------------------
def _pack_gate_weights(wx, wh, b, hp):
    # wx: (4, Cf, Hn)  wh: (4, Hn, Hn)  b: (4, 1, Hn); gate order (i, f, o, g).
    # Each gate occupies hp (>= Hn, 128-aligned) lanes; padding is zero so the
    # padded hidden units stay exactly 0 through the whole recurrence.
    _, cf, hn = wx.shape
    gp = 4 * hp
    wx_cat = jnp.zeros((cf, gp), jnp.float32)
    wh_cat = jnp.zeros((hp, gp), jnp.float32)
    b_cat = jnp.zeros((1, gp), jnp.float32)
    for k in range(4):
        wx_cat = wx_cat.at[:, k * hp:k * hp + hn].set(wx[k])
        wh_cat = wh_cat.at[:hn, k * hp:k * hp + hn].set(wh[k])
        b_cat = b_cat.at[:, k * hp:k * hp + hn].set(b[k])
    return wx_cat, wh_cat, b_cat


# ------------------------------- DFF forward ----------------------------------
def dff_forward(f_map, a_map, c_center, params, beta):
    wx, wh, b = params
    B, Cf, Hh, Ww = f_map.shape
    M = a_map.shape[1]
    HW = Hh * Ww
    HWp = _round_up(HW, 128)         # lane-dense, unmasked MXU contraction dim
    Hn = wh.shape[-1]
    Hp = _round_up(Hn, 128)          # lane-dense hidden size (padding stays 0)
    Gp = 4 * Hp

    wx_cat, wh_cat, b_cat = _pack_gate_weights(wx, wh, b, Hp)
    wx_cat = wx_cat.astype(COMPUTE_DTYPE)
    wh_cat = wh_cat.astype(COMPUTE_DTYPE)

    a2 = a_map.reshape(B, M, HW).astype(COMPUTE_DTYPE)
    f2 = f_map.reshape(B, Cf, HW).astype(COMPUTE_DTYPE)
    if HWp != HW:                    # zero padding is numerically free for the dot
        a2 = jnp.pad(a2, ((0, 0), (0, 0), (0, HWp - HW)))
        f2 = jnp.pad(f2, ((0, 0), (0, 0), (0, HWp - HW)))
    c2 = c_center.reshape(M, Cf).astype(jnp.float32)

    vmem_limit = _vmem_limit_bytes()
    in_bytes = jnp.dtype(COMPUTE_DTYPE).itemsize
    bt = _pick_batch_tile(B, M, Cf, HWp, Gp, in_bytes, in_bytes,
                          budget=int(vmem_limit * 0.8))

    # TODO(synk): on v7x split the batch grid across the two TensorCores with
    # per-core partial (s1, s2) stats and a tiny final combine; the resident RC
    # accumulator currently forces the batch axis onto one core ("arbitrary").
    xw, loss, c_new = pl.pallas_call(
        functools.partial(bap_rc_proj_kernel,
                          inv_hw=1.0 / HW, beta=float(beta),
                          total_b=float(B), inv_bd=1.0 / (B * M * Cf)),
        out_shape=(
            jax.ShapeDtypeStruct((B, M, Gp), COMPUTE_DTYPE),  # x@Wx + b pre-acts
            jax.ShapeDtypeStruct((1, 1), jnp.float32),        # RC loss
            jax.ShapeDtypeStruct((M, Cf), jnp.float32),       # updated center
        ),
        grid_spec=pltpu.PrefetchScalarGridSpec(
            num_scalar_prefetch=0,
            grid=(B // bt,),
            in_specs=[
                pl.BlockSpec((bt, M, HWp), lambda i: (i, 0, 0)),
                pl.BlockSpec((bt, Cf, HWp), lambda i: (i, 0, 0)),
                # constant-index operands: fetched once by the pipeline; their
                # (default double-buffered) footprint is accounted for in the
                # batch-tile VMEM budget above.
                pl.BlockSpec((M, Cf), lambda i: (0, 0)),
                pl.BlockSpec((Cf, Gp), lambda i: (0, 0)),
                pl.BlockSpec((1, Gp), lambda i: (0, 0)),
            ],
            out_specs=(
                pl.BlockSpec((bt, M, Gp), lambda i: (i, 0, 0)),
                pl.BlockSpec((1, 1), lambda i: (0, 0)),
                pl.BlockSpec((M, Cf), lambda i: (0, 0)),
            ),
            scratch_shapes=[
                pltpu.VMEM((M, Cf), jnp.float32),   # sum_b (V - C_old)
                pltpu.VMEM((M, Cf), jnp.float32),   # sum_b (V - C_old)^2
            ],
        ),
        # The batch axis carries the RC-loss accumulator -> "arbitrary".
        compiler_params=pltpu.CompilerParams(
            dimension_semantics=("arbitrary",),
            vmem_limit_bytes=vmem_limit,
        ),
    )(a2, f2, c2, wx_cat, b_cat)

    # Recurrence: ONE grid step.  The whole xw block (B*M*Gp elements, a few MB
    # at real CFJLNet shapes) plus Wh stays resident in VMEM and the timesteps
    # are statically unrolled, so there is no per-timestep grid overhead and no
    # HBM transpose of xw between the two kernels.
    h_pad = pl.pallas_call(
        functools.partial(lstm_recurrence_kernel, hp=Hp, m=M),
        out_shape=jax.ShapeDtypeStruct((B, Hp), jnp.float32),
        grid_spec=pltpu.PrefetchScalarGridSpec(
            num_scalar_prefetch=0,
            grid=(1,),
            in_specs=[
                pl.BlockSpec((B, M, Gp), lambda i: (0, 0, 0)),
                pl.BlockSpec((Hp, Gp), lambda i: (0, 0)),
            ],
            out_specs=pl.BlockSpec((B, Hp), lambda i: (0, 0)),
        ),
        compiler_params=pltpu.CompilerParams(
            dimension_semantics=("arbitrary",),
            vmem_limit_bytes=vmem_limit,
        ),
    )(xw, wh_cat)

    h = h_pad[:, :Hn]
    return h, loss[0, 0], c_new.reshape(1, M * Cf)


# --------------------------- parameter init -----------------------------------
def init_params(key, feature_size, num_hiddens):
    # Deterministic Linear-style init; gate order is (i, f, o, c/g).
    keys = jax.random.split(key, 16)

    def lin(k, fan_in, shape):
        bound = 1.0 / (fan_in ** 0.5)
        return jax.random.uniform(k, shape, jnp.float32, -bound, bound)

    wx = jnp.stack([lin(keys[j], feature_size, (feature_size, num_hiddens))
                    for j in range(4)])                    # (4, Cf, H)
    wh = jnp.stack([lin(keys[4 + j], num_hiddens, (num_hiddens, num_hiddens))
                    for j in range(4)])                    # (4, H, H)
    bx = jnp.stack([lin(keys[8 + j], feature_size, (1, num_hiddens))
                    for j in range(4)])
    bh = jnp.stack([lin(keys[12 + j], num_hiddens, (1, num_hiddens))
                    for j in range(4)])
    b = bx + bh                                            # (4, 1, H)
    return wx, wh, b


# --------------------------- pure-JAX reference --------------------------------
def dff_ref(f_map, a_map, c_center, params, beta):
    wx, wh, b = params
    B, Cf, Hh, Ww = f_map.shape
    M = a_map.shape[1]
    v3 = jnp.einsum('bmhw,bchw->bmc', a_map, f_map) / (Hh * Ww)
    v = v3.reshape(B, M * Cf)
    tmp = jnp.sum(v - c_center, axis=0, keepdims=True)
    c_new = c_center + beta * tmp / B
    loss = jnp.mean((v - c_new) ** 2)
    h = jnp.zeros((B, wh.shape[-1]), jnp.float32)
    c = jnp.zeros_like(h)
    for t in range(M):
        x = v3[:, t, :]
        gates = [x @ wx[k] + h @ wh[k] + b[k] for k in range(4)]
        i = jax.nn.sigmoid(gates[0])
        f = jax.nn.sigmoid(gates[1])
        o = jax.nn.sigmoid(gates[2])
        g = jnp.tanh(gates[3])
        c = f * c + i * g
        h = o * jnp.tanh(c)
    return h, loss, c_new


if __name__ == "__main__":
    B, Cf, Hh, Ww = 2, 4, 8, 8           # feature maps (B, Cf, H, W)
    M, num_hiddens, beta = 4, 32, 0.05   # attention maps / LSTM hidden / RC beta

    key = jax.random.PRNGKey(0)
    k1, k2, k3, k4 = jax.random.split(key, 4)
    f_map = jax.random.normal(k1, (B, Cf, Hh, Ww), jnp.float32)
    a_map = jax.random.normal(k2, (B, M, Hh, Ww), jnp.float32)
    c_center = jax.random.normal(k3, (1, M * Cf), jnp.float32)
    params = init_params(k4, Cf, num_hiddens)

    h, loss, c_new = dff_forward(f_map, a_map, c_center, params, beta)
    jax.block_until_ready((h, loss, c_new))

    h_r, loss_r, c_r = dff_ref(f_map, a_map, c_center, params, beta)
    assert jnp.allclose(h, h_r, atol=5e-3, rtol=5e-3)
    assert jnp.allclose(loss, loss_r, atol=5e-3, rtol=5e-3)
    assert jnp.allclose(c_new, c_r, atol=5e-3, rtol=5e-3)

    print("KERNEL_OK")
</pallas_src>

<mosaic_0001>
module attributes {stable_mosaic.version = 11 : i64} {
  func.func @bap_rc_proj_kernel(%arg0: i32, %arg1: memref<2x4x128xf32, #tpu.memory_space<vmem>>, %arg2: memref<2x4x128xf32, #tpu.memory_space<vmem>>, %arg3: memref<4x4xf32, #tpu.memory_space<vmem>>, %arg4: memref<4x512xf32, #tpu.memory_space<vmem>>, %arg5: memref<1x512xf32, #tpu.memory_space<vmem>>, %arg6: memref<2x4x512xf32, #tpu.memory_space<vmem>>, %arg7: memref<1x1xf32, #tpu.memory_space<vmem>>, %arg8: memref<4x4xf32, #tpu.memory_space<vmem>>, %arg9: memref<4x4xf32, #tpu.memory_space<vmem>>, %arg10: memref<4x4xf32, #tpu.memory_space<vmem>>) attributes {dimension_semantics = [#tpu.dimension_semantics<arbitrary>], iteration_bounds = array<i64: 1>, scalar_prefetch = 0 : i64, scratch_operands = 2 : i64, tpu.core_type = #tpu.core_type<tc>, window_params = [{transform_indices = @transform_0, window_bounds = array<i64: 2, 4, 128>}, {transform_indices = @transform_1, window_bounds = array<i64: 2, 4, 128>}, {pipeline_mode = #tpu.pipeline_mode<synchronous>, transform_indices = @transform_2, window_bounds = array<i64: 4, 4>}, {pipeline_mode = #tpu.pipeline_mode<synchronous>, transform_indices = @transform_3, window_bounds = array<i64: 4, 512>}, {pipeline_mode = #tpu.pipeline_mode<synchronous>, transform_indices = @transform_4, window_bounds = array<i64: 1, 512>}, {transform_indices = @transform_5, window_bounds = array<i64: 2, 4, 512>}, {pipeline_mode = #tpu.pipeline_mode<synchronous>, transform_indices = @transform_6, window_bounds = array<i64: 1, 1>}, {pipeline_mode = #tpu.pipeline_mode<synchronous>, transform_indices = @transform_7, window_bounds = array<i64: 4, 4>}]} {
    %c0 = arith.constant 0 : index
    %c0_0 = arith.constant 0 : index
    %0 = vector.load %arg3[%c0, %c0_0] : memref<4x4xf32, #tpu.memory_space<vmem>>, vector<4x4xf32>
    %c0_1 = arith.constant 0 : index
    %c0_2 = arith.constant 0 : index
    %c0_3 = arith.constant 0 : index
    %1 = vector.load %arg1[%c0_1, %c0_2, %c0_3] : memref<2x4x128xf32, #tpu.memory_space<vmem>>, vector<1x4x128xf32>
    %2 = vector.shape_cast %1 : vector<1x4x128xf32> to vector<4x128xf32>
    %c0_4 = arith.constant 0 : index
    %c0_5 = arith.constant 0 : index
    %c0_6 = arith.constant 0 : index
    %3 = vector.load %arg2[%c0_4, %c0_5, %c0_6] : memref<2x4x128xf32, #tpu.memory_space<vmem>>, vector<1x4x128xf32>
    %4 = vector.shape_cast %3 : vector<1x4x128xf32> to vector<4x128xf32>
    %cst = arith.constant dense<0.000000e+00> : vector<4x4xf32>
    %5 = tpu.matmul %2, %4, %cst {dimension_numbers = #tpu.dot_dimension_numbers<[1], [1], [0], [0], [0, 0, 1, 0], [], []>} : vector<4x128xf32>, vector<4x128xf32>, vector<4x4xf32> -> vector<4x4xf32>
    %cst_7 = arith.constant 1.562500e-02 : f32
    %6 = vector.broadcast %cst_7 : f32 to vector<4x4xf32>
    %7 = arith.mulf %5, %6 : vector<4x4xf32>
    %8 = arith.subf %7, %0 : vector<4x4xf32>
    %9 = arith.mulf %8, %8 : vector<4x4xf32>
    %c1 = arith.constant 1 : index
    %c0_8 = arith.constant 0 : index
    %c0_9 = arith.constant 0 : index
    %10 = vector.load %arg1[%c1, %c0_8, %c0_9] : memref<2x4x128xf32, #tpu.memory_space<vmem>>, vector<1x4x128xf32>
    %11 = vector.shape_cast %10 : vector<1x4x128xf32> to vector<4x128xf32>
    %c1_10 = arith.constant 1 : index
    %c0_11 = arith.constant 0 : index
    %c0_12 = arith.constant 0 : index
    %12 = vector.load %arg2[%c1_10, %c0_11, %c0_12] : memref<2x4x128xf32, #tpu.memory_space<vmem>>, vector<1x4x128xf32>
    %13 = vector.shape_cast %12 : vector<1x4x128xf32> to vector<4x128xf32>
    %cst_13 = arith.constant dense<0.000000e+00> : vector<4x4xf32>
    %14 = tpu.matmul %11, %13, %cst_13 {dimension_numbers = #tpu.dot_dimension_numbers<[1], [1], [0], [0], [0, 0, 1, 0], [], []>} : vector<4x128xf32>, vector<4x128xf32>, vector<4x4xf32> -> vector<4x4xf32>
    %cst_14 = arith.constant 1.562500e-02 : f32
    %15 = vector.broadcast %cst_14 : f32 to vector<4x4xf32>
    %16 = arith.mulf %14, %15 : vector<4x4xf32>
    %17 = arith.subf %16, %0 : vector<4x4xf32>
    %18 = arith.addf %8, %17 : vector<4x4xf32>
    %19 = arith.mulf %17, %17 : vector<4x4xf32>
    %20 = arith.addf %9, %19 : vector<4x4xf32>
    %21 = tpu.concatenate %7, %16 in 0 : vector<4x4xf32>, vector<4x4xf32> -> vector<8x4xf32>
    %c0_15 = arith.constant 0 : index
    %c0_16 = arith.constant 0 : index
    %22 = vector.load %arg4[%c0_15, %c0_16] : memref<4x512xf32, #tpu.memory_space<vmem>>, vector<4x512xf32>
    %cst_17 = arith.constant dense<0.000000e+00> : vector<8x512xf32>
    %23 = tpu.matmul %21, %22, %cst_17 {dimension_numbers = #tpu.dot_dimension_numbers<[1], [0], [0], [1], [0, 0, 1, 1], [], []>} : vector<8x4xf32>, vector<4x512xf32>, vector<8x512xf32> -> vector<8x512xf32>
    %c0_18 = arith.constant 0 : index
    %c0_19 = arith.constant 0 : index
    %24 = vector.load %arg5[%c0_18, %c0_19] : memref<1x512xf32, #tpu.memory_space<vmem>>, vector<1x512xf32>
    %25 = vector.broadcast %24 : vector<1x512xf32> to vector<8x512xf32>
    %26 = arith.addf %23, %25 : vector<8x512xf32>
    %27 = vector.extract_strided_slice %26 {offsets = [0, 0], sizes = [4, 512], strides = [1, 1]} : vector<8x512xf32> to vector<4x512xf32>
    %c0_20 = arith.constant 0 : index
    %c0_21 = arith.constant 0 : index
    %c0_22 = arith.constant 0 : index
    %28 = vector.load %arg6[%c0_20, %c0_21, %c0_22] : memref<2x4x512xf32, #tpu.memory_space<vmem>>, vector<1x4x512xf32>
    %29 = vector.shape_cast %28 : vector<1x4x512xf32> to vector<4x512xf32>
    %30 = vector.shape_cast %27 : vector<4x512xf32> to vector<1x4x512xf32>
    tpu.vector_store %arg6[%c0_20, %c0_21, %c0_22], %30 {strides = array<i32>} : memref<2x4x512xf32, #tpu.memory_space<vmem>>, vector<1x4x512xf32>,
    %31 = vector.extract_strided_slice %26 {offsets = [4, 0], sizes = [4, 512], strides = [1, 1]} : vector<8x512xf32> to vector<4x512xf32>
    %c1_23 = arith.constant 1 : index
    %c0_24 = arith.constant 0 : index
    %c0_25 = arith.constant 0 : index
    %32 = vector.load %arg6[%c1_23, %c0_24, %c0_25] : memref<2x4x512xf32, #tpu.memory_space<vmem>>, vector<1x4x512xf32>
    %33 = vector.shape_cast %32 : vector<1x4x512xf32> to vector<4x512xf32>
    %34 = vector.shape_cast %31 : vector<4x512xf32> to vector<1x4x512xf32>
    tpu.vector_store %arg6[%c1_23, %c0_24, %c0_25], %34 {strides = array<i32>} : memref<2x4x512xf32, #tpu.memory_space<vmem>>, vector<1x4x512xf32>,
    %c0_i32 = arith.constant 0 : i32
    %35 = arith.cmpi eq, %arg0, %c0_i32 : i32
    %36 = arith.extui %35 : i1 to i32
    %c0_i32_26 = arith.constant 0 : i32
    %37 = arith.cmpi ne, %36, %c0_i32_26 : i32
    scf.if %37 {
      %cst_37 = arith.constant 0.000000e+00 : f32
      %47 = vector.broadcast %cst_37 : f32 to vector<4x4xf32>
      %c0_38 = arith.constant 0 : index
      %c0_39 = arith.constant 0 : index
      %48 = vector.load %arg9[%c0_38, %c0_39] : memref<4x4xf32, #tpu.memory_space<vmem>>, vector<4x4xf32>
      tpu.vector_store %arg9[%c0_38, %c0_39], %47 {strides = array<i32>} : memref<4x4xf32, #tpu.memory_space<vmem>>, vector<4x4xf32>,
      %cst_40 = arith.constant 0.000000e+00 : f32
      %49 = vector.broadcast %cst_40 : f32 to vector<4x4xf32>
      %c0_41 = arith.constant 0 : index
      %c0_42 = arith.constant 0 : index
      %50 = vector.load %arg10[%c0_41, %c0_42] : memref<4x4xf32, #tpu.memory_space<vmem>>, vector<4x4xf32>
      tpu.vector_store %arg10[%c0_41, %c0_42], %49 {strides = array<i32>} : memref<4x4xf32, #tpu.memory_space<vmem>>, vector<4x4xf32>,
    } else {
    }
    %c0_27 = arith.constant 0 : index
    %c0_28 = arith.constant 0 : index
    %38 = vector.load %arg9[%c0_27, %c0_28] : memref<4x4xf32, #tpu.memory_space<vmem>>, vector<4x4xf32>
    %39 = arith.addf %38, %18 : vector<4x4xf32>
    %c0_29 = arith.constant 0 : index
    %c0_30 = arith.constant 0 : index
    %40 = vector.load %arg9[%c0_29, %c0_30] : memref<4x4xf32, #tpu.memory_space<vmem>>, vector<4x4xf32>
    tpu.vector_store %arg9[%c0_29, %c0_30], %39 {strides = array<i32>} : memref<4x4xf32, #tpu.memory_space<vmem>>, vector<4x4xf32>,
    %c0_31 = arith.constant 0 : index
    %c0_32 = arith.constant 0 : index
    %41 = vector.load %arg10[%c0_31, %c0_32] : memref<4x4xf32, #tpu.memory_space<vmem>>, vector<4x4xf32>
    %42 = arith.addf %41, %20 : vector<4x4xf32>
    %c0_33 = arith.constant 0 : index
    %c0_34 = arith.constant 0 : index
    %43 = vector.load %arg10[%c0_33, %c0_34] : memref<4x4xf32, #tpu.memory_space<vmem>>, vector<4x4xf32>
    tpu.vector_store %arg10[%c0_33, %c0_34], %42 {strides = array<i32>} : memref<4x4xf32, #tpu.memory_space<vmem>>, vector<4x4xf32>,
    %c0_i32_35 = arith.constant 0 : i32
    %44 = arith.cmpi eq, %arg0, %c0_i32_35 : i32
    %45 = arith.extui %44 : i1 to i32
    %c0_i32_36 = arith.constant 0 : i32
    %46 = arith.cmpi ne, %45, %c0_i32_36 : i32
    scf.if %46 {
      %c0_37 = arith.constant 0 : index
      %c0_38 = arith.constant 0 : index
      %47 = vector.load %arg9[%c0_37, %c0_38] : memref<4x4xf32, #tpu.memory_space<vmem>>, vector<4x4xf32>
      %c0_39 = arith.constant 0 : index
      %c0_40 = arith.constant 0 : index
      %48 = vector.load %arg10[%c0_39, %c0_40] : memref<4x4xf32, #tpu.memory_space<vmem>>, vector<4x4xf32>
      %cst_41 = arith.constant 2.500000e-02 : f32
      %49 = vector.broadcast %cst_41 : f32 to vector<4x4xf32>
      %50 = arith.mulf %49, %47 : vector<4x4xf32>
      %51 = arith.addf %0, %50 : vector<4x4xf32>
      %c0_42 = arith.constant 0 : index
      %c0_43 = arith.constant 0 : index
      %52 = vector.load %arg8[%c0_42, %c0_43] : memref<4x4xf32, #tpu.memory_space<vmem>>, vector<4x4xf32>
      tpu.vector_store %arg8[%c0_42, %c0_43], %51 {strides = array<i32>} : memref<4x4xf32, #tpu.memory_space<vmem>>, vector<4x4xf32>,
      %53 = arith.mulf %47, %47 : vector<4x4xf32>
      %54 = vector.shape_cast %53 : vector<4x4xf32> to vector<1x4x4xf32>
      %cst_44 = arith.constant dense<0.000000e+00> : vector<1xf32>
      %55 = vector.multi_reduction <add>, %54, %cst_44 [1, 2] : vector<1x4x4xf32> to vector<1xf32>
      %56 = vector.shape_cast %55 : vector<1xf32> to vector<1x1x1xf32>
      %57 = vector.extract %56[0, 0, 0] : f32 from vector<1x1x1xf32>
      %58 = vector.broadcast %57 : f32 to vector<1x1xf32>
      %59 = vector.shape_cast %48 : vector<4x4xf32> to vector<1x4x4xf32>
      %cst_45 = arith.constant dense<0.000000e+00> : vector<1xf32>
      %60 = vector.multi_reduction <add>, %59, %cst_45 [1, 2] : vector<1x4x4xf32> to vector<1xf32>
      %61 = vector.shape_cast %60 : vector<1xf32> to vector<1x1x1xf32>
      %62 = vector.extract %61[0, 0, 0] : f32 from vector<1x1x1xf32>
      %63 = vector.broadcast %62 : f32 to vector<1x1xf32>
      %cst_46 = arith.constant -4.875000e-02 : f32
      %64 = vector.broadcast %cst_46 : f32 to vector<1x1xf32>
      %65 = arith.mulf %64, %58 : vector<1x1xf32>
      %66 = arith.addf %63, %65 : vector<1x1xf32>
      %cst_47 = arith.constant 3.125000e-02 : f32
      %67 = vector.broadcast %cst_47 : f32 to vector<1x1xf32>
      %68 = arith.mulf %66, %67 : vector<1x1xf32>
      %c0_48 = arith.constant 0 : index
      %c0_49 = arith.constant 0 : index
      %69 = vector.load %arg7[%c0_48, %c0_49] : memref<1x1xf32, #tpu.memory_space<vmem>>, vector<1x1xf32>
      tpu.vector_store %arg7[%c0_48, %c0_49], %68 {strides = array<i32>} : memref<1x1xf32, #tpu.memory_space<vmem>>, vector<1x1xf32>,
    } else {
    }
    return
  }
  func.func @transform_0(%arg0: i32) -> (i32, i32, i32) {
    %c0_i32 = arith.constant 0 : i32
    %c0_i32_0 = arith.constant 0 : i32
    %c0_i32_1 = arith.constant 0 : i32
    return %arg0, %c0_i32, %c0_i32_0 : i32, i32, i32
  }
  func.func @transform_1(%arg0: i32) -> (i32, i32, i32) {
    %c0_i32 = arith.constant 0 : i32
    %c0_i32_0 = arith.constant 0 : i32
    %c0_i32_1 = arith.constant 0 : i32
    return %arg0, %c0_i32, %c0_i32_0 : i32, i32, i32
  }
  func.func @transform_2(%arg0: i32) -> (i32, i32) {
    %c0_i32 = arith.constant 0 : i32
    %c0_i32_0 = arith.constant 0 : i32
    %c0_i32_1 = arith.constant 0 : i32
    return %c0_i32, %c0_i32_0 : i32, i32
  }
  func.func @transform_3(%arg0: i32) -> (i32, i32) {
    %c0_i32 = arith.constant 0 : i32
    %c0_i32_0 = arith.constant 0 : i32
    %c0_i32_1 = arith.constant 0 : i32
    return %c0_i32, %c0_i32_0 : i32, i32
  }
  func.func @transform_4(%arg0: i32) -> (i32, i32) {
    %c0_i32 = arith.constant 0 : i32
    %c0_i32_0 = arith.constant 0 : i32
    %c0_i32_1 = arith.constant 0 : i32
    return %c0_i32, %c0_i32_0 : i32, i32
  }
  func.func @transform_5(%arg0: i32) -> (i32, i32, i32) {
    %c0_i32 = arith.constant 0 : i32
    %c0_i32_0 = arith.constant 0 : i32
    %c0_i32_1 = arith.constant 0 : i32
    return %arg0, %c0_i32, %c0_i32_0 : i32, i32, i32
  }
  func.func @transform_6(%arg0: i32) -> (i32, i32) {
    %c0_i32 = arith.constant 0 : i32
    %c0_i32_0 = arith.constant 0 : i32
    %c0_i32_1 = arith.constant 0 : i32
    return %c0_i32, %c0_i32_0 : i32, i32
  }
  func.func @transform_7(%arg0: i32) -> (i32, i32) {
    %c0_i32 = arith.constant 0 : i32
    %c0_i32_0 = arith.constant 0 : i32
    %c0_i32_1 = arith.constant 0 : i32
    return %c0_i32, %c0_i32_0 : i32, i32
  }
}

</mosaic_0001>

<llo_original>
// kernel: tpu_custom_call.1
$region0: #{tpu_custom_call.1}
  #allocation0 [shape = 'u32[]', space=smem, size = 0x4, offset = 0x4, fixed_abs, tag = 'smem constant byte address 0x4 - core index']
  #allocation1 [shape = 'u32[72,128]{1,0:T(1,128)}', space=vmem, size = 0x9000, scoped, tag = 'internal scratch']
  #allocation2 [shape = 'f32[4,4]{1,0:T(4,128)}', space=vmem, size = 0x800, scoped, tag = 'scratch operand']
  #allocation3 [shape = 'f32[4,4]{1,0:T(4,128)}', space=vmem, size = 0x800, scoped, tag = 'scratch operand']
  %s0 = inlined_call_operand.hbm [shape: f32[2,4,128], index: 0, kind: input, shape index: {}]
  %s1 = inlined_call_operand.hbm [shape: f32[2,4,128], index: 1, kind: input, shape index: {}]
  %s2 = inlined_call_operand.hbm [shape: f32[4,4], index: 2, kind: input, shape index: {}]
  %s3 = inlined_call_operand.hbm [shape: f32[4,512], index: 3, kind: input, shape index: {}]
  %s4 = inlined_call_operand.hbm [shape: f32[1,512], index: 4, kind: input, shape index: {}]
  %s5 = inlined_call_operand.hbm [shape: f32[2,4,512], index: 5, kind: output, shape index: {0}]
  %s6 = inlined_call_operand.hbm [shape: f32[1,1], index: 6, kind: output, shape index: {1}]
  %s7 = inlined_call_operand.hbm [shape: f32[4,4], index: 7, kind: output, shape index: {2}]
  %8 = xla_tuple %s5, %s6, %s7
  %s9 = sld [smem:[#allocation0]]
  $region74: #{tpu_custom_call.1} parent=0
    _
  %s11 = ssub.s32 1, %s9
  %s12 = scalar_select 0, %s11, %s9
  $region1: #{tpu_custom_call.1} parent=0
    #allocation4 [shape = 'u8[4096]{0}', space=vmem, size = 0x1000, scoped, tag = 'input window, operand 0, single buffered']
    #allocation5 [shape = 's32[1]{0}', space=sflag, size = 0x4, scoped, tag = 'scoped memory for tpu_custom_call.1']
    #allocation6 [shape = 's32[1]{0}', space=sflag, size = 0x4, scoped, tag = 'scoped memory for tpu_custom_call.1']
    #allocation7 [shape = 'u8[4096]{0}', space=vmem, size = 0x1000, scoped, tag = 'input window, operand 1, single buffered']
    #allocation8 [shape = 's32[1]{0}', space=sflag, size = 0x4, scoped, tag = 'scoped memory for tpu_custom_call.1']
    #allocation9 [shape = 'u8[2048]{0}', space=vmem, size = 0x800, scoped, tag = 'input window, operand 2, single buffered']
    #allocation10 [shape = 'u8[8192]{0}', space=vmem, size = 0x2000, scoped, tag = 'input window, operand 3, single buffered']
    #allocation11 [shape = 's32[1]{0}', space=sflag, size = 0x4, scoped, tag = 'scoped memory for tpu_custom_call.1']
    #allocation12 [shape = 'u8[2048]{0}', space=vmem, size = 0x800, scoped, tag = 'input window, operand 4, single buffered']
    #allocation13 [shape = 'u8[16384]{0}', space=vmem, size = 0x4000, scoped, tag = 'output window, operand 0, single buffered']
    #allocation14 [shape = 'u8[512]{0}', space=vmem, size = 0x400, scoped, tag = 'output window, operand 1, single buffered']
    #allocation15 [shape = 's32[1]{0}', space=sflag, size = 0x4, scoped, tag = 'scoped memory for tpu_custom_call.1']
    #allocation16 [shape = 'u8[2048]{0}', space=vmem, size = 0x800, scoped, tag = 'output window, operand 2, single buffered']
    %13 = vsyncpa [#allocation5], 0
    %14 = vsyncpa [#allocation8], 0
    %15 = vsyncpa [#allocation11], 0
    %16 = vsyncpa [#allocation6], 0
    %17 = vsyncpa [#allocation15], 0
    // Predicated region
    $region2: #{tpu_custom_call.1} parent=1 // pred_check
      _
    $region3: #{tpu_custom_call.1} parent=1 // pred_check_branch
      %19 = sbr.rel (0) target = $region5
    $region4: #{tpu_custom_call.1} parent=1 // pred_region
      %21 = vsyncadd [#allocation5], 0
      %s22 = sshll.u32 %s0, 4
      %s23 = int_to_ptr.hbm [resolvable:$true] %s22
      %s24 = sshll.u32 [#allocation4], 4
      %s25 = int_to_ptr.vmem [resolvable:$true] %s24
      %30 = dma.hbm_to_vmem [thread:$0]  %s23, 128, %s25, [#allocation5], 64, 64, 4
    $region5: #{tpu_custom_call.1} parent=1 // pred_fallthru
      _
    // Predicated region
    $region6: #{tpu_custom_call.1} parent=1 // pred_check
      _
    $region7: #{tpu_custom_call.1} parent=1 // pred_check_branch
      %32 = sbr.rel (0) target = $region9
    $region8: #{tpu_custom_call.1} parent=1 // pred_region
      %34 = vsyncadd [#allocation8], 0
      %s35 = sshll.u32 %s1, 4
      %s36 = int_to_ptr.hbm [resolvable:$true] %s35
      %s37 = sshll.u32 [#allocation7], 4
      %s38 = int_to_ptr.vmem [resolvable:$true] %s37
      %43 = dma.hbm_to_vmem [thread:$0]  %s36, 128, %s38, [#allocation8], 64, 64, 4
    $region9: #{tpu_custom_call.1} parent=1 // pred_fallthru
      _
    // Predicated region
    $region10: #{tpu_custom_call.1} parent=1 // pred_check
      _
    $region11: #{tpu_custom_call.1} parent=1 // pred_check_branch
      %45 = sbr.rel (0) target = $region13
    $region12: #{tpu_custom_call.1} parent=1 // pred_region
      %47 = vsyncadd [#allocation8], 0
      %s49 = sshll.u32 %s2, 4
      %s50 = int_to_ptr.hbm [resolvable:$true] %s49
      %s51 = sshll.u32 [#allocation9], 4
      %s52 = int_to_ptr.vmem [resolvable:$true] %s51
      %54 = dma.hbm_to_vmem [thread:$0]  %s50, 64, %s52, [#allocation8]
    $region13: #{tpu_custom_call.1} parent=1 // pred_fallthru
      _
    // Predicated region
    $region14: #{tpu_custom_call.1} parent=1 // pred_check
      _
    $region15: #{tpu_custom_call.1} parent=1 // pred_check_branch
      %56 = sbr.rel (0) target = $region17
    $region16: #{tpu_custom_call.1} parent=1 // pred_region
      %58 = vsyncadd [#allocation11], 0
      %s60 = sshll.u32 %s3, 4
      %s61 = int_to_ptr.hbm [resolvable:$true] %s60
      %s62 = sshll.u32 [#allocation10], 4
      %s63 = int_to_ptr.vmem [resolvable:$true] %s62
      %65 = dma.hbm_to_vmem [thread:$0]  %s61, 256, %s63, [#allocation11]
    $region17: #{tpu_custom_call.1} parent=1 // pred_fallthru
      _
    // Predicated region
    $region18: #{tpu_custom_call.1} parent=1 // pred_check
      _
    $region19: #{tpu_custom_call.1} parent=1 // pred_check_branch
      %67 = sbr.rel (0) target = $region21
    $region20: #{tpu_custom_call.1} parent=1 // pred_region
      %69 = vsyncadd [#allocation11], 0
      %s71 = sshll.u32 %s4, 4
      %s72 = int_to_ptr.hbm [resolvable:$true] %s71
      %s73 = sshll.u32 [#allocation12], 4
      %s74 = int_to_ptr.vmem [resolvable:$true] %s73
      %76 = dma.hbm_to_vmem [thread:$0]  %s72, 64, %s74, [#allocation11]
    $region21: #{tpu_custom_call.1} parent=1 // pred_fallthru
      _
    // Predicated region
    $region22: #{tpu_custom_call.1} parent=1 // pred_check
      _
    $region23: #{tpu_custom_call.1} parent=1 // pred_check_branch
      %78 = sbr.rel (0) target = $region25
    $region24: #{tpu_custom_call.1} parent=1 // pred_region
      %80 = dma.done [#allocation5], 128
    $region25: #{tpu_custom_call.1} parent=1 // pred_fallthru
      _
    // Predicated region
    $region26: #{tpu_custom_call.1} parent=1 // pred_check
      _
    $region27: #{tpu_custom_call.1} parent=1 // pred_check_branch
      %82 = sbr.rel (0) target = $region29
    $region28: #{tpu_custom_call.1} parent=1 // pred_region
      %84 = dma.done [#allocation8], 128
    $region29: #{tpu_custom_call.1} parent=1 // pred_fallthru
      _
    // Predicated region
    $region30: #{tpu_custom_call.1} parent=1 // pred_check
      _
    $region31: #{tpu_custom_call.1} parent=1 // pred_check_branch
      %86 = sbr.rel (0) target = $region33
    $region32: #{tpu_custom_call.1} parent=1 // pred_region
      %88 = dma.done [#allocation8], 64
    $region33: #{tpu_custom_call.1} parent=1 // pred_fallthru
      _
    // Predicated region
    $region34: #{tpu_custom_call.1} parent=1 // pred_check
      _
    $region35: #{tpu_custom_call.1} parent=1 // pred_check_branch
      %90 = sbr.rel (0) target = $region37
    $region36: #{tpu_custom_call.1} parent=1 // pred_region
      %92 = dma.done [#allocation11], 256
    $region37: #{tpu_custom_call.1} parent=1 // pred_fallthru
      _
    // Predicated region
    $region38: #{tpu_custom_call.1} parent=1 // pred_check
      _
    $region39: #{tpu_custom_call.1} parent=1 // pred_check_branch
      %94 = sbr.rel (0) target = $region41
    $region40: #{tpu_custom_call.1} parent=1 // pred_region
      %96 = dma.done [#allocation11], 64
    $region41: #{tpu_custom_call.1} parent=1 // pred_fallthru
      _
    %v97 = vld [vmem:[#allocation9] sm:$0xf]
    %v98 = vld [vmem:[#allocation4] sm:$0xf]
    %v99 = vld [vmem:[#allocation7] sm:$0xf]
    %100 = vmatpush.xpose.msra.mxu0 0.0
    %101 = vmatpush.xpose.msra.mxu0 0.0
    %102 = vmatpush.xpose.msra.mxu0 0.0
    %103 = vmatpush.xpose.msra.mxu0 0.0
    %104 = vmatpush.xpose.msra.mxu0 0.0
    %105 = vmatpush.xpose.msra.mxu0 0.0
    %106 = vmatpush.xpose.msra.mxu0 0.0
    %107 = vmatpush.xpose.msra.mxu0 0.0
    %108 = vmatpush.xpose.msra.mxu0 0.0
    %109 = vmatpush.xpose.msra.mxu0 0.0
    %110 = vmatpush.xpose.msra.mxu0 0.0
    %111 = vmatpush.xpose.msra.mxu0 0.0
    %112 = vmatpush.xpose.msra.mxu0 0.0
    %113 = vmatpush.xpose.msra.mxu0 0.0
    %114 = vmatpush.xpose.msra.mxu0 0.0
    %115 = vmatpush.xpose.msra.mxu0 %v99
    %116 = vmatmul.f32.gmra.mxu0 %v98
    %v117 = vpop.f32.mrf.mxu0
    %v118 = vadd.f32 0.0, %v117
    %119 = vdwg.mxu0
    %v120 = vmul.f32 %v118, 0.015625
    %v121 = vsub.f32 %v120, %v97
    %v122 = vmul.f32 %v121, %v121
    %s123 = scalar_lea.vmem [#allocation4], 4
    %v124 = vld [vmem:[%s123] sm:$0xf]
    %s125 = scalar_lea.vmem [#allocation7], 4
    %v126 = vld [vmem:[%s125] sm:$0xf]
    %127 = vmatpush.xpose.msra.mxu0 0.0
    %128 = vmatpush.xpose.msra.mxu0 0.0
    %129 = vmatpush.xpose.msra.mxu0 0.0
    %130 = vmatpush.xpose.msra.mxu0 0.0
    %131 = vmatpush.xpose.msra.mxu0 0.0
    %132 = vmatpush.xpose.msra.mxu0 0.0
    %133 = vmatpush.xpose.msra.mxu0 0.0
    %134 = vmatpush.xpose.msra.mxu0 0.0
    %135 = vmatpush.xpose.msra.mxu0 0.0
    %136 = vmatpush.xpose.msra.mxu0 0.0
    %137 = vmatpush.xpose.msra.mxu0 0.0
    %138 = vmatpush.xpose.msra.mxu0 0.0
    %139 = vmatpush.xpose.msra.mxu0 0.0
    %140 = vmatpush.xpose.msra.mxu0 0.0
    %141 = vmatpush.xpose.msra.mxu0 0.0
    %142 = vmatpush.xpose.msra.mxu0 %v126
    %143 = vmatmul.f32.gmra.mxu0 %v124
    %v144 = vpop.f32.mrf.mxu0
    %v145 = vadd.f32 0.0, %v144
    %146 = vdwg.mxu0
    %v147 = vmul.f32 %v145, 0.015625
    %v148 = vsub.f32 %v147, %v97
    %v149 = vadd.f32 %v121, %v148
    %v150 = vmul.f32 %v148, %v148
    %v151 = vadd.f32 %v122, %v150
    %v153 = vrot.slane %v147, 4
    %vm155 = vcmask 1043456
    %v156 = vsel %vm155, %v120, %v153
    %v157 = vld [vmem:[#allocation10] sm:$0xff]
    %v158 = vld [vmem:[#allocation10 + $0x8] sm:$0xff]
    %v159 = vld [vmem:[#allocation12] sm:$0xf]
    %v161 = vperm.slane %v159, 0
    %v162 = vperm.slane %v159, 1
    %v163 = vperm.slane %v159, 2
    %v164 = vperm.slane %v159, 3
    %171 = vst [vmem:[#allocation1] ss:$2 sm:$0xff] %v157
    %s172 = scalar_lea.vmem [#allocation1], 16
    %173 = vst [vmem:[%s172] ss:$2 sm:$0xff] %v158
    %v174 = vld.sshfl [vmem:[#allocation1] sm:$0xff pattern:$0x75316420]
    %v175 = vld.sshfl [vmem:[#allocation1 + $0x8] sm:$0xff pattern:$0x75316420]
    %v176 = vld.sshfl [vmem:[#allocation1 + $0x10] sm:$0xff pattern:$0x75316420]
    %v177 = vld.sshfl [vmem:[#allocation1 + $0x18] sm:$0xff pattern:$0x75316420]
    %vm178 = vcmask 31744
    %v180 = vsel %vm178, %v156, 0
    %v182 = vsel %vm155, %v174, 0
    %v184 = vsel %vm155, %v175, 0
    %v186 = vsel %vm155, %v176, 0
    %v188 = vsel %vm155, %v177, 0
    %190 = vmatpush.msra.mxu0 0.0
    %191 = vmatpush.msra.mxu0 0.0
    %192 = vmatpush.msra.mxu0 0.0
    %193 = vmatpush.msra.mxu0 0.0
    %194 = vmatpush.msra.mxu0 0.0
    %195 = vmatpush.msra.mxu0 0.0
    %196 = vmatpush.msra.mxu0 0.0
    %197 = vmatpush.msra.mxu0 0.0
    %198 = vmatpush.msra.mxu0 0.0
    %199 = vmatpush.msra.mxu0 0.0
    %200 = vmatpush.msra.mxu0 0.0
    %201 = vmatpush.msra.mxu0 0.0
    %202 = vmatpush.msra.mxu0 0.0
    %203 = vmatpush.msra.mxu0 0.0
    %204 = vmatpush.msra.mxu0 0.0
    %205 = vmatpush.msra.mxu0 %v182
    %206 = vmatmul.f32.gmra.mxu0 %v180
    %v207 = vpop.f32.mrf.mxu0
    %v208 = vadd.f32 %v161, %v207
    %209 = vdwg.mxu0
    %210 = vmatpush.msra.mxu0 0.0
    %211 = vmatpush.msra.mxu0 0.0
    %212 = vmatpush.msra.mxu0 0.0
    %213 = vmatpush.msra.mxu0 0.0
    %214 = vmatpush.msra.mxu0 0.0
    %215 = vmatpush.msra.mxu0 0.0
    %216 = vmatpush.msra.mxu0 0.0
    %217 = vmatpush.msra.mxu0 0.0
    %218 = vmatpush.msra.mxu0 0.0
    %219 = vmatpush.msra.mxu0 0.0
    %220 = vmatpush.msra.mxu0 0.0
    %221 = vmatpush.msra.mxu0 0.0
    %222 = vmatpush.msra.mxu0 0.0
    %223 = vmatpush.msra.mxu0 0.0
    %224 = vmatpush.msra.mxu0 0.0
    %225 = vmatpush.msra.mxu0 %v184
    %226 = vmatmul.f32.gmra.mxu0 %v180
    %v227 = vpop.f32.mrf.mxu0
    %v228 = vadd.f32 %v162, %v227
    %229 = vdwg.mxu0
    %230 = vmatpush.msra.mxu0 0.0
    %231 = vmatpush.msra.mxu0 0.0
    %232 = vmatpush.msra.mxu0 0.0
    %233 = vmatpush.msra.mxu0 0.0
    %234 = vmatpush.msra.mxu0 0.0
    %235 = vmatpush.msra.mxu0 0.0
    %236 = vmatpush.msra.mxu0 0.0
    %237 = vmatpush.msra.mxu0 0.0
    %238 = vmatpush.msra.mxu0 0.0
    %239 = vmatpush.msra.mxu0 0.0
    %240 = vmatpush.msra.mxu0 0.0
    %241 = vmatpush.msra.mxu0 0.0
    %242 = vmatpush.msra.mxu0 0.0
    %243 = vmatpush.msra.mxu0 0.0
    %244 = vmatpush.msra.mxu0 0.0
    %245 = vmatpush.msra.mxu0 %v186
    %246 = vmatmul.f32.gmra.mxu0 %v180
    %v247 = vpop.f32.mrf.mxu0
    %v248 = vadd.f32 %v163, %v247
    %249 = vdwg.mxu0
    %250 = vmatpush.msra.mxu0 0.0
    %251 = vmatpush.msra.mxu0 0.0
    %252 = vmatpush.msra.mxu0 0.0
    %253 = vmatpush.msra.mxu0 0.0
    %254 = vmatpush.msra.mxu0 0.0
    %255 = vmatpush.msra.mxu0 0.0
    %256 = vmatpush.msra.mxu0 0.0
    %257 = vmatpush.msra.mxu0 0.0
    %258 = vmatpush.msra.mxu0 0.0
    %259 = vmatpush.msra.mxu0 0.0
    %260 = vmatpush.msra.mxu0 0.0
    %261 = vmatpush.msra.mxu0 0.0
    %262 = vmatpush.msra.mxu0 0.0
    %263 = vmatpush.msra.mxu0 0.0
    %264 = vmatpush.msra.mxu0 0.0
    %265 = vmatpush.msra.mxu0 %v188
    %266 = vmatmul.f32.gmra.mxu0 %v180
    %v267 = vpop.f32.mrf.mxu0
    %v268 = vadd.f32 %v164, %v267
    %269 = vdwg.mxu0
    %v274 = vrot.slane %v228, 4
    %v275 = vrot.slane %v268, 4
    %v276 = vsel %vm155, %v208, %v274
    %v277 = vsel %vm155, %v248, %v275
    %280 = vst [vmem:[#allocation13] sm:$0xff] %v276
    %281 = vst [vmem:[#allocation13 + $0x8] sm:$0xff] %v277
    %282 = vst.sshfl [vmem:[#allocation1] sm:$0xff pattern:$0x75316420] %v208
    %283 = vst.sshfl [vmem:[#allocation1 + $0x8] sm:$0xff pattern:$0x75316420] %v228
    %284 = vst.sshfl [vmem:[#allocation1 + $0x10] sm:$0xff pattern:$0x75316420] %v248
    %285 = vst.sshfl [vmem:[#allocation1 + $0x18] sm:$0xff pattern:$0x75316420] %v268
    %s286 = scalar_lea.vmem [#allocation1], 1
    %v287 = vld [vmem:[%s286] ss:$2 sm:$0xff]
    %s288 = scalar_lea.vmem [#allocation1], 17
    %v289 = vld [vmem:[%s288] ss:$2 sm:$0xff]
    %s292 = scalar_lea.vmem [#allocation13], 16
    %293 = vst [vmem:[%s292] sm:$0xff] %v287
    %294 = vst [vmem:[%s292 + $0x8] sm:$0xff] %v289
    %p295 = scmp.eq.s32.totalorder 0, 0
    // Predicated region
    $region42: #{tpu_custom_call.1} parent=1 // pred_check
      %p296 = pneg %p295
    $region43: #{tpu_custom_call.1} parent=1 // pred_check_branch
      %298 = sbr.rel (%p296) target = $region45
    $region44: #{tpu_custom_call.1} parent=1 // pred_region
      %vm299 = vcmask 27648
      %300 = vst.msk [vmem:[#allocation2] sm:$0xf] %vm299, 0.0
      %301 = vst.msk [vmem:[#allocation3] sm:$0xf] %vm299, 0.0
    $region45: #{tpu_custom_call.1} parent=1 // pred_fallthru
      _
    %v302 = vld [vmem:[#allocation2] sm:$0xf]
    %v303 = vadd.f32 %v302, %v149
    %vm304 = vcmask 27648
    %305 = vst.msk [vmem:[#allocation2] sm:$0xf] %vm304, %v303
    %v306 = vld [vmem:[#allocation3] sm:$0xf]
    %v307 = vadd.f32 %v306, %v151
    %308 = vst.msk [vmem:[#allocation3] sm:$0xf] %vm304, %v307
    // Predicated region
    $region46: #{tpu_custom_call.1} parent=1 // pred_check
      %p309 = pneg %p295
    $region47: #{tpu_custom_call.1} parent=1 // pred_check_branch
      %311 = sbr.rel (%p309) target = $region49
    $region48: #{tpu_custom_call.1} parent=1 // pred_region
      %v312 = vld [vmem:[#allocation2] sm:$0xf]
      %v313 = vld [vmem:[#allocation3] sm:$0xf]
      %v314 = vmul.f32 %v312, 0.025
      %v315 = vadd.f32 %v97, %v314
      %316 = vst.msk [vmem:[#allocation16] sm:$0xf] %vm304, %v315
      %v317 = vmul.f32 %v312, %v312
      %v318 = vsel %vm304, %v317, 0.0
      %319 = vadd.xlane.f32.xlu0 %v318
      %v320 = vpop.xlane.xlu0 %319
      %v321 = vrot.slane %v320, 4
      %v322 = vadd.f32 %v320, %v321
      %v323 = vrot.slane %v322, 2
      %v324 = vadd.f32 %v322, %v323
      %v325 = vrot.slane %v324, 1
      %v326 = vadd.f32 %v324, %v325
      %s327 = vtos %v326
      %v328 = vstv %s327
      %v329 = vsel %vm304, %v313, 0.0
      %330 = vadd.xlane.f32.xlu0 %v329
      %v331 = vpop.xlane.xlu0 %330
      %v332 = vrot.slane %v331, 4
      %v333 = vadd.f32 %v331, %v332
      %v334 = vrot.slane %v333, 2
      %v335 = vadd.f32 %v333, %v334
      %v336 = vrot.slane %v335, 1
      %v337 = vadd.f32 %v335, %v336
      %s338 = vtos %v337
      %v339 = vstv %s338
      %v340 = vmul.f32 %v328, -0.04875
      %v341 = vadd.f32 %v339, %v340
      %v342 = vmul.f32 %v341, 0.03125
      %vm343 = vcmask 0
      %344 = vst.msk [vmem:[#allocation14] sm:$0x1] %vm343, %v342
    $region49: #{tpu_custom_call.1} parent=1 // pred_fallthru
      _
    // Predicated region
    $region50: #{tpu_custom_call.1} parent=1 // pred_check
      _
    $region51: #{tpu_custom_call.1} parent=1 // pred_check_branch
      %346 = sbr.rel (0) target = $region53
    $region52: #{tpu_custom_call.1} parent=1 // pred_region
      %348 = vsyncadd [#allocation6], 0
      %s349 = sshll.u32 [#allocation13], 4
      %s350 = int_to_ptr.vmem [resolvable:$true] %s349
      %s351 = sshll.u32 %s5, 4
      %s352 = int_to_ptr.hbm [resolvable:$true] %s351
      %357 = dma.vmem_to_hbm [thread:$0]  %s350, 512, %s352, [#allocation6], 256, 256, 16
    $region53: #{tpu_custom_call.1} parent=1 // pred_fallthru
      _
    // Predicated region
    $region54: #{tpu_custom_call.1} parent=1 // pred_check
      _
    $region55: #{tpu_custom_call.1} parent=1 // pred_check_branch
      %359 = sbr.rel (0) target = $region57
    $region56: #{tpu_custom_call.1} parent=1 // pred_region
      %361 = vsyncadd [#allocation15], 0
      %s363 = sshll.u32 [#allocation14], 4
      %s364 = int_to_ptr.vmem [resolvable:$true] %s363
      %s365 = sshll.u32 %s6, 4
      %s366 = int_to_ptr.hbm [resolvable:$true] %s365
      %368 = dma.vmem_to_hbm [thread:$0]  %s364, 16, %s366, [#allocation15]
    $region57: #{tpu_custom_call.1} parent=1 // pred_fallthru
      _
    // Predicated region
    $region58: #{tpu_custom_call.1} parent=1 // pred_check
      _
    $region59: #{tpu_custom_call.1} parent=1 // pred_check_branch
      %370 = sbr.rel (0) target = $region61
    $region60: #{tpu_custom_call.1} parent=1 // pred_region
      %372 = vsyncadd [#allocation15], 0
      %s374 = sshll.u32 [#allocation16], 4
      %s375 = int_to_ptr.vmem [resolvable:$true] %s374
      %s376 = sshll.u32 %s7, 4
      %s377 = int_to_ptr.hbm [resolvable:$true] %s376
      %379 = dma.vmem_to_hbm [thread:$0]  %s375, 64, %s377, [#allocation15]
    $region61: #{tpu_custom_call.1} parent=1 // pred_fallthru
      _
    // Predicated region
    $region62: #{tpu_custom_call.1} parent=1 // pred_check
      _
    $region63: #{tpu_custom_call.1} parent=1 // pred_check_branch
      %381 = sbr.rel (0) target = $region65
    $region64: #{tpu_custom_call.1} parent=1 // pred_region
      %383 = dma.done [#allocation6], 512
    $region65: #{tpu_custom_call.1} parent=1 // pred_fallthru
      _
    // Predicated region
    $region66: #{tpu_custom_call.1} parent=1 // pred_check
      _
    $region67: #{tpu_custom_call.1} parent=1 // pred_check_branch
      %385 = sbr.rel (0) target = $region69
    $region68: #{tpu_custom_call.1} parent=1 // pred_region
      %387 = dma.done [#allocation15], 16
    $region69: #{tpu_custom_call.1} parent=1 // pred_fallthru
      _
    // Predicated region
    $region70: #{tpu_custom_call.1} parent=1 // pred_check
      _
    $region71: #{tpu_custom_call.1} parent=1 // pred_check_branch
      %389 = sbr.rel (0) target = $region73
    $region72: #{tpu_custom_call.1} parent=1 // pred_region
      %391 = dma.done [#allocation15], 64
    $region73: #{tpu_custom_call.1} parent=1 // pred_fallthru
      _
    %392 = vsyncpa [#allocation5], 1
    %393 = vsyncpa [#allocation8], 1
    %394 = vsyncpa [#allocation11], 1
    %395 = vsyncpa [#allocation6], 1
    %396 = vsyncpa [#allocation15], 1

</llo_original>
